<compile_context>
chip_gen: v7x
topology: tpu7x:2x2x1
jax: 0.10.0
libtpu: 0.0.40
codegen_flags: <defaults>
</compile_context>

<pallas_src>
import functools

import jax
import jax.numpy as jnp
from jax.experimental import pallas as pl
from jax.experimental.pallas import tpu as pltpu

_N_ROWS = 100  # torch .view(100, 10)
_N_COLS = 10


def _info_nce_kernel(x_ref, out_ref, *, size_average: bool):
    # x_ref: (100, 10) row-major block, exactly the torch .view(100, 10) layout.
    x = x_ref[...].astype(jnp.float32)
    pos = x[:, 0:1]                                # torch.index_select(new_probs, 1, [0])
    row_sum = jnp.sum(x, axis=1, keepdims=True)    # torch.sum(new_probs, dim=1).view(100, 1)
    # log(pos / sum) == log(pos) - log(sum), elementwise; then a single reduce.
    d = jnp.log(pos) - jnp.log(row_sum)            # (100, 1)
    total = jnp.sum(d)
    if size_average:
        total = total * (1.0 / _N_ROWS)            # loss.mean() over the 100 rows
    out_ref[0, 0] = total


def info_nce_loss(inp, target=None, size_average=True):
    # `target` is unused by the reference module's forward; kept for API parity.
    # torch .view(100, 10) is a free row-major reshape (same as jnp.reshape):
    # no transpose HLO, no copy. Dtype is preserved (cast happens in-kernel).
    x = jnp.reshape(inp, (_N_ROWS, _N_COLS))

    kernel = functools.partial(_info_nce_kernel, size_average=size_average)

    out = pl.pallas_call(
        kernel,
        out_shape=jax.ShapeDtypeStruct((1, 1), jnp.float32),
        in_specs=[pl.BlockSpec(memory_space=pltpu.VMEM)],
        out_specs=pl.BlockSpec(memory_space=pltpu.SMEM),
        cost_estimate=pl.CostEstimate(
            flops=3 * _N_ROWS * _N_COLS,
            transcendentals=2 * _N_ROWS,
            bytes_accessed=_N_ROWS * _N_COLS * jnp.dtype(x.dtype).itemsize + 4,
        ),
    )(x)
    return out[0, 0]


def info_nce_loss_ref(inp, size_average=True):
    new_probs = jnp.reshape(inp, (_N_ROWS, _N_COLS)).astype(jnp.float32)
    pos = new_probs[:, 0:1]
    s = jnp.sum(new_probs, axis=1, keepdims=True)
    loss = jnp.log(pos / s)
    return jnp.mean(loss) if size_average else jnp.sum(loss)


if __name__ == "__main__":
    key = jax.random.PRNGKey(0)
    k_in, k_tgt = jax.random.split(key)
    # The module's forward requires exactly 1000 elements (view(100, 10)).
    # Use strictly-positive "probabilities" so log() is finite.
    x = jax.random.uniform(k_in, (100, 10), dtype=jnp.float32, minval=0.05, maxval=1.0)
    target = jax.random.uniform(k_tgt, (100, 10), dtype=jnp.float32)  # unused by forward

    loss = jax.block_until_ready(info_nce_loss(x, target, size_average=True))
    ref = info_nce_loss_ref(x, size_average=True)
    assert jnp.allclose(loss, ref, rtol=1e-5, atol=1e-6), (loss, ref)

    loss_sum = jax.block_until_ready(info_nce_loss(x, target, size_average=False))
    ref_sum = info_nce_loss_ref(x, size_average=False)
    assert jnp.allclose(loss_sum, ref_sum, rtol=1e-5, atol=1e-4), (loss_sum, ref_sum)

    print("KERNEL_OK")
</pallas_src>

<mosaic_0001>
module attributes {stable_mosaic.version = 11 : i64} {
  func.func @_info_nce_kernel(%arg0: memref<100x10xf32, #tpu.memory_space<vmem>>, %arg1: memref<1x1xf32, #tpu.memory_space<smem>>) attributes {dimension_semantics = [], scalar_prefetch = 0 : i64, scratch_operands = 0 : i64, tpu.core_type = #tpu.core_type<tc>} {
    %c0 = arith.constant 0 : index
    %c0_0 = arith.constant 0 : index
    %0 = vector.load %arg0[%c0, %c0_0] : memref<100x10xf32, #tpu.memory_space<vmem>>, vector<100x10xf32>
    %1 = vector.extract_strided_slice %0 {offsets = [0, 0], sizes = [100, 1], strides = [1, 1]} : vector<100x10xf32> to vector<100x1xf32>
    %cst = arith.constant dense<0.000000e+00> : vector<100xf32>
    %2 = vector.multi_reduction <add>, %0, %cst [1] : vector<100x10xf32> to vector<100xf32>
    %3 = vector.shape_cast %2 : vector<100xf32> to vector<100x1xf32>
    %4 = math.log %1 : vector<100x1xf32>
    %5 = math.log %3 : vector<100x1xf32>
    %6 = arith.subf %4, %5 : vector<100x1xf32>
    %7 = vector.shape_cast %6 : vector<100x1xf32> to vector<1x100x1xf32>
    %cst_1 = arith.constant dense<0.000000e+00> : vector<1xf32>
    %8 = vector.multi_reduction <add>, %7, %cst_1 [1, 2] : vector<1x100x1xf32> to vector<1xf32>
    %9 = vector.shape_cast %8 : vector<1xf32> to vector<1x1x1xf32>
    %10 = vector.extract %9[0, 0, 0] : f32 from vector<1x1x1xf32>
    %cst_2 = arith.constant 0.00999999977 : f32
    %11 = arith.mulf %10, %cst_2 : f32
    %c0_3 = arith.constant 0 : index
    %c0_4 = arith.constant 0 : index
    %12 = memref.load %arg1[%c0_3, %c0_4] : memref<1x1xf32, #tpu.memory_space<smem>>
    memref.store %11, %arg1[%c0_3, %c0_4] : memref<1x1xf32, #tpu.memory_space<smem>>
    return
  }
}

</mosaic_0001>

<llo_original>
// kernel: tpu_custom_call.1
$region0: #{tpu_custom_call.1}
  #allocation0 [shape = 'u32[]', space=smem, size = 0x4, offset = 0x4, fixed_abs, tag = 'smem constant byte address 0x4 - core index']
  #allocation1 [shape = 'u32[144,128]{1,0:T(1,128)}', space=vmem, size = 0x12000, scoped, tag = 'internal scratch']
  %s0 = inlined_call_operand.vmem [shape: f32[100,10], index: 0, kind: input, shape index: {}]
  %s1 = inlined_call_operand.hbm [shape: f32[1,1], index: 1, kind: output, shape index: {}]
  %s2 = sld [smem:[#allocation0]]
  $region14: #{tpu_custom_call.1} parent=0
    _
  %s4 = ssub.s32 1, %s2
  %s5 = scalar_select 0, %s4, %s2
  $region1: #{tpu_custom_call.1} parent=0
    #allocation2 [shape = 'u8[512]{0}', space=smem, size = 0x200, scoped, tag = 'output window, operand 0, single buffered']
    #allocation3 [shape = 's32[1]{0}', space=sflag, size = 0x4, scoped, tag = 'scoped memory for tpu_custom_call.1']
    %6 = vsyncpa [#allocation3], 0
    // Predicated region
    $region2: #{tpu_custom_call.1} parent=1 // pred_check
      _
    $region3: #{tpu_custom_call.1} parent=1 // pred_check_branch
      %8 = sbr.rel (0) target = $region5
    $region4: #{tpu_custom_call.1} parent=1 // pred_region
      _
    $region5: #{tpu_custom_call.1} parent=1 // pred_fallthru
      _
    %v9 = vld [vmem:[%s0] sm:$0xff]
    %v10 = vld [vmem:[%s0 + $0x8] sm:$0xff]
    %v11 = vld [vmem:[%s0 + $0x10] sm:$0xff]
    %v12 = vld [vmem:[%s0 + $0x18] sm:$0xff]
    %v13 = vld [vmem:[%s0 + $0x20] sm:$0xff]
    %v14 = vld [vmem:[%s0 + $0x28] sm:$0xff]
    %v15 = vld [vmem:[%s0 + $0x30] sm:$0xff]
    %v16 = vld [vmem:[%s0 + $0x38] sm:$0xff]
    %v17 = vld [vmem:[%s0 + $0x40] sm:$0xff]
    %v18 = vld [vmem:[%s0 + $0x48] sm:$0xff]
    %v19 = vld [vmem:[%s0 + $0x50] sm:$0xff]
    %v20 = vld [vmem:[%s0 + $0x58] sm:$0xff]
    %v21 = vld [vmem:[%s0 + $0x60] sm:$0xf]
    %vm22 = vcmask 80896
    %v23 = vsel %vm22, %v9, 0.0
    %24 = vadd.xlane.f32.xlu0 %v23
    %v25 = vpop.xlane.xlu0 %24
    %v26 = vsel %vm22, %v10, 0.0
    %27 = vadd.xlane.f32.xlu0 %v26
    %v28 = vpop.xlane.xlu0 %27
    %v29 = vsel %vm22, %v11, 0.0
    %30 = vadd.xlane.f32.xlu0 %v29
    %v31 = vpop.xlane.xlu0 %30
    %v32 = vsel %vm22, %v12, 0.0
    %33 = vadd.xlane.f32.xlu0 %v32
    %v34 = vpop.xlane.xlu0 %33
    %v35 = vsel %vm22, %v13, 0.0
    %36 = vadd.xlane.f32.xlu0 %v35
    %v37 = vpop.xlane.xlu0 %36
    %v38 = vsel %vm22, %v14, 0.0
    %39 = vadd.xlane.f32.xlu0 %v38
    %v40 = vpop.xlane.xlu0 %39
    %v41 = vsel %vm22, %v15, 0.0
    %42 = vadd.xlane.f32.xlu0 %v41
    %v43 = vpop.xlane.xlu0 %42
    %v44 = vsel %vm22, %v16, 0.0
    %45 = vadd.xlane.f32.xlu0 %v44
    %v46 = vpop.xlane.xlu0 %45
    %v47 = vsel %vm22, %v17, 0.0
    %48 = vadd.xlane.f32.xlu0 %v47
    %v49 = vpop.xlane.xlu0 %48
    %v50 = vsel %vm22, %v18, 0.0
    %51 = vadd.xlane.f32.xlu0 %v50
    %v52 = vpop.xlane.xlu0 %51
    %v53 = vsel %vm22, %v19, 0.0
    %54 = vadd.xlane.f32.xlu0 %v53
    %v55 = vpop.xlane.xlu0 %54
    %v56 = vsel %vm22, %v20, 0.0
    %57 = vadd.xlane.f32.xlu0 %v56
    %v58 = vpop.xlane.xlu0 %57
    %vm59 = vcmask 76800
    %v60 = vsel %vm59, %v21, 0.0
    %61 = vadd.xlane.f32.xlu0 %v60
    %v62 = vpop.xlane.xlu0 %61
    %v63 = vlog2.pop %v9
    %v64 = vmul.f32 %v63, 0.6931472
    %v65 = vlog2.pop %v10
    %v66 = vmul.f32 %v65, 0.6931472
    %v67 = vlog2.pop %v11
    %v68 = vmul.f32 %v67, 0.6931472
    %v69 = vlog2.pop %v12
    %v70 = vmul.f32 %v69, 0.6931472
    %v71 = vlog2.pop %v13
    %v72 = vmul.f32 %v71, 0.6931472
    %v73 = vlog2.pop %v14
    %v74 = vmul.f32 %v73, 0.6931472
    %v75 = vlog2.pop %v15
    %v76 = vmul.f32 %v75, 0.6931472
    %v77 = vlog2.pop %v16
    %v78 = vmul.f32 %v77, 0.6931472
    %v79 = vlog2.pop %v17
    %v80 = vmul.f32 %v79, 0.6931472
    %v81 = vlog2.pop %v18
    %v82 = vmul.f32 %v81, 0.6931472
    %v83 = vlog2.pop %v19
    %v84 = vmul.f32 %v83, 0.6931472
    %v85 = vlog2.pop %v20
    %v86 = vmul.f32 %v85, 0.6931472
    %v87 = vlog2.pop %v21
    %v88 = vmul.f32 %v87, 0.6931472
    %v89 = vlog2.pop %v25
    %v90 = vmul.f32 %v89, 0.6931472
    %v91 = vlog2.pop %v28
    %v92 = vmul.f32 %v91, 0.6931472
    %v93 = vlog2.pop %v31
    %v94 = vmul.f32 %v93, 0.6931472
    %v95 = vlog2.pop %v34
    %v96 = vmul.f32 %v95, 0.6931472
    %v97 = vlog2.pop %v37
    %v98 = vmul.f32 %v97, 0.6931472
    %v99 = vlog2.pop %v40
    %v100 = vmul.f32 %v99, 0.6931472
    %v101 = vlog2.pop %v43
    %v102 = vmul.f32 %v101, 0.6931472
    %v103 = vlog2.pop %v46
    %v104 = vmul.f32 %v103, 0.6931472
    %v105 = vlog2.pop %v49
    %v106 = vmul.f32 %v105, 0.6931472
    %v107 = vlog2.pop %v52
    %v108 = vmul.f32 %v107, 0.6931472
    %v109 = vlog2.pop %v55
    %v110 = vmul.f32 %v109, 0.6931472
    %v111 = vlog2.pop %v58
    %v112 = vmul.f32 %v111, 0.6931472
    %v113 = vlog2.pop %v62
    %v114 = vmul.f32 %v113, 0.6931472
    %v115 = vsub.f32 %v64, %v90
    %v116 = vsub.f32 %v66, %v92
    %v117 = vsub.f32 %v68, %v94
    %v118 = vsub.f32 %v70, %v96
    %v119 = vsub.f32 %v72, %v98
    %v120 = vsub.f32 %v74, %v100
    %v121 = vsub.f32 %v76, %v102
    %v122 = vsub.f32 %v78, %v104
    %v123 = vsub.f32 %v80, %v106
    %v124 = vsub.f32 %v82, %v108
    %v125 = vsub.f32 %v84, %v110
    %v126 = vsub.f32 %v86, %v112
    %v127 = vsub.f32 %v88, %v114
    %vm128 = vcmask 7168
    %v129 = vsel %vm128, %v115, 0.0
    %v130 = vsel %vm128, %v116, 0.0
    %v131 = vadd.f32 %v129, %v130
    %v132 = vsel %vm128, %v117, 0.0
    %v133 = vadd.f32 %v131, %v132
    %v134 = vsel %vm128, %v118, 0.0
    %v135 = vadd.f32 %v133, %v134
    %v136 = vsel %vm128, %v119, 0.0
    %v137 = vadd.f32 %v135, %v136
    %v138 = vsel %vm128, %v120, 0.0
    %v139 = vadd.f32 %v137, %v138
    %v140 = vsel %vm128, %v121, 0.0
    %v141 = vadd.f32 %v139, %v140
    %v142 = vsel %vm128, %v122, 0.0
    %v143 = vadd.f32 %v141, %v142
    %v144 = vsel %vm128, %v123, 0.0
    %v145 = vadd.f32 %v143, %v144
    %v146 = vsel %vm128, %v124, 0.0
    %v147 = vadd.f32 %v145, %v146
    %v148 = vsel %vm128, %v125, 0.0
    %v149 = vadd.f32 %v147, %v148
    %v150 = vsel %vm128, %v126, 0.0
    %v151 = vadd.f32 %v149, %v150
    %vm152 = vcmask 3072
    %v153 = vsel %vm152, %v127, 0.0
    %v154 = vadd.f32 %v151, %v153
    %155 = vadd.xlane.f32.xlu0 %v154
    %v156 = vpop.xlane.xlu0 %155
    %v157 = vrot.slane %v156, 4
    %v158 = vadd.f32 %v156, %v157
    %v159 = vrot.slane %v158, 2
    %v160 = vadd.f32 %v158, %v159
    %v161 = vrot.slane %v160, 1
    %v162 = vadd.f32 %v160, %v161
    %s163 = vtos %v162
    %s164 = smul.f32 %s163, 0.01
    %s165 = scalar_lea.smem [#allocation2], 0
    %166 = sst [smem:[%s165]] %s164
    // Predicated region
    $region6: #{tpu_custom_call.1} parent=1 // pred_check
      _
    $region7: #{tpu_custom_call.1} parent=1 // pred_check_branch
      %168 = sbr.rel (0) target = $region9
    $region8: #{tpu_custom_call.1} parent=1 // pred_region
      %s170 = ssub.s32 16, 16
      %171 = vsyncadd [#allocation3], %s170
      %174 = dma.smem_to_hbm [#allocation2], 16, %s1, [#allocation3]
    $region9: #{tpu_custom_call.1} parent=1 // pred_fallthru
      _
    // Predicated region
    $region10: #{tpu_custom_call.1} parent=1 // pred_check
      _
    $region11: #{tpu_custom_call.1} parent=1 // pred_check_branch
      %176 = sbr.rel (0) target = $region13
    $region12: #{tpu_custom_call.1} parent=1 // pred_region
      %177 = dma.done [#allocation3], 16
    $region13: #{tpu_custom_call.1} parent=1 // pred_fallthru
      _
    %178 = sfence
    %179 = vsyncpa [#allocation3], 1

</llo_original>
